<compile_context>
chip_gen: v7x
topology: tpu7x:2x2x1
jax: 0.10.0
libtpu: 0.0.40
codegen_flags: <defaults>
</compile_context>

<pallas_src>
import jax
import jax.numpy as jnp
from jax import lax
from jax.experimental import pallas as pl
from jax.experimental.pallas import tpu as pltpu
import numpy as np

_LANE = 128
_MIN_TILE = 8192        # never shrink below the previously validated tile size
_MIN_TOTAL_STEPS = 8    # ~2 TCs (v7x) x a few pipeline steps each


def _head_kernel(x_ref, w_ref, b_ref, o_ref):
    # x_ref: (C_in, TS)  w_ref: (C_out, C_in)  b_ref: (C_out, 1)  o_ref: (C_out, TS)
    # Channel contraction on the MXU.  With K=C_in tiny it is mostly padding, but the
    # kernel is HBM-bound so it hides under DMA time on v6e/v7x; swap for an unrolled
    # VPU MAC only if a v5e bundle dump ever shows vmatmul/vpop as the binding slot.
    acc = jnp.dot(w_ref[...], x_ref[...], preferred_element_type=jnp.float32)
    acc = acc + b_ref[...].astype(jnp.float32)            # bias broadcast over lanes
    # Sigmoid via tanh: single EUP op, keeps the divide off the VALU slot.
    o_ref[...] = (0.5 * (jnp.tanh(0.5 * acc) + 1.0)).astype(o_ref.dtype)


def _round_up(x, m):
    return ((x + m - 1) // m) * m


def _choose_tile_s(dhw, n_batch, target=32768):
    """Lane-dense (multiple-of-128) voxel tile, grid-aware.

    Big tiles amortise per-step grid overhead; but keep at least ~8 total grid
    steps (when that doesn't force tiles below _MIN_TILE) so both v7x cores get
    work and the pipeline has depth.  Exact divisors of dhw are only preferred
    when >= half the chosen tile (avoids degenerate 128-wide tiles).
    """
    dhw_pad = _round_up(max(dhw, 1), _LANE)
    t = min(_round_up(target, _LANE), dhw_pad)
    while n_batch * pl.cdiv(dhw, t) < _MIN_TOTAL_STEPS and t // 2 >= _MIN_TILE:
        t = _round_up(t // 2, _LANE)
    lo = max(t // 2, _LANE)
    for cand in range(t, lo - 1, -_LANE):   # exact divisor -> no wasted partial tail
        if dhw % cand == 0:
            return cand
    return t


def simple_head_forward(x, weight, bias, *, gradient_detached=True,
                        tile_s=None, out_dtype=None):
    """x: (N, C_in, D, H, W). weight: (C_out, C_in, 1, 1, 1). bias: (C_out,)."""
    if gradient_detached:
        x = lax.stop_gradient(x)             # forward no-op, matches inp.detach()

    N, C_in, D, H, W = x.shape
    C_out = weight.shape[0]
    dhw = D * H * W
    out_dtype = x.dtype if out_dtype is None else out_dtype

    # Free views only — no transposes, pads or slices (no extra HBM passes).
    x_flat = x.reshape(N, C_in, dhw)
    w_mat = weight.reshape(C_out, C_in).astype(x.dtype)   # tiny; match activation dtype
    b_col = bias.reshape(C_out, 1).astype(jnp.float32)

    if tile_s is None:
        tile_s = _choose_tile_s(dhw, N)
    tile_s = max(_LANE, _round_up(tile_s, _LANE))
    s_tiles = pl.cdiv(dhw, tile_s)          # ragged tail = Pallas partial boundary block

    flops = 2 * N * C_out * C_in * dhw
    transcendentals = N * C_out * dhw
    bytes_accessed = (x_flat.size * x_flat.dtype.itemsize
                      + w_mat.size * w_mat.dtype.itemsize
                      + b_col.size * 4
                      + N * C_out * dhw * np.dtype(out_dtype).itemsize)

    out_flat = pl.pallas_call(
        _head_kernel,
        out_shape=jax.ShapeDtypeStruct((N, C_out, dhw), out_dtype),
        grid_spec=pltpu.PrefetchScalarGridSpec(
            num_scalar_prefetch=0,
            grid=(N, s_tiles),
            in_specs=[
                # Activation tile: voxels on the lane axis, channels on sublanes.
                pl.BlockSpec((pl.Squeezed(), C_in, tile_s), lambda n, s: (n, 0, s)),
                # Tiny weight / bias stay resident across the whole grid.
                pl.BlockSpec((C_out, C_in), lambda n, s: (0, 0)),
                pl.BlockSpec((C_out, 1), lambda n, s: (0, 0)),
            ],
            out_specs=pl.BlockSpec((pl.Squeezed(), C_out, tile_s),
                                   lambda n, s: (n, 0, s)),
        ),
        compiler_params=pltpu.CompilerParams(
            dimension_semantics=("parallel", "parallel"),
            vmem_limit_bytes=32 * 1024 * 1024,   # headroom for 32K-voxel tiles on v5e
        ),
        cost_estimate=pl.CostEstimate(flops=flops,
                                      transcendentals=transcendentals,
                                      bytes_accessed=bytes_accessed),
    )(x_flat, w_mat, b_col)

    return out_flat.reshape(N, C_out, D, H, W)


def _reference(x, weight, bias):
    C_out, C_in = weight.shape[0], weight.shape[1]
    w_mat = weight.reshape(C_out, C_in)
    return jax.nn.sigmoid(
        jnp.einsum("ncdhw,oc->nodhw", x, w_mat) + bias[None, :, None, None, None]
    )


if __name__ == "__main__":
    key = jax.random.PRNGKey(0)
    k_x, k_w, k_b, k_x2 = jax.random.split(key, 4)

    N, C_in, C_out = 2, 4, 8

    # Deterministic parameters (shapes match nn.Conv3d(in, out, 1)).
    weight = jax.random.normal(k_w, (C_out, C_in, 1, 1, 1), dtype=jnp.float32) * 0.1
    bias = jax.random.normal(k_b, (C_out,), dtype=jnp.float32) * 0.1

    # Lane-friendly voxel count (8*8*8 = 512 -> one 512-wide spatial block).
    D, H, W = 8, 8, 8
    x = jax.random.normal(k_x, (N, C_in, D, H, W), dtype=jnp.float32)
    out = jax.block_until_ready(simple_head_forward(x, weight, bias))
    np.testing.assert_allclose(np.asarray(out),
                               np.asarray(_reference(x, weight, bias)),
                               atol=1e-5, rtol=1e-5)
    assert out.shape == (N, C_out, D, H, W)

    # Ragged voxel count (5*6*7 = 210) exercises the Pallas partial-tail block path
    # (no host-side pad or output slice any more).
    D2, H2, W2 = 5, 6, 7
    x2 = jax.random.normal(k_x2, (N, C_in, D2, H2, W2), dtype=jnp.float32)
    out2 = jax.block_until_ready(simple_head_forward(x2, weight, bias))
    np.testing.assert_allclose(np.asarray(out2),
                               np.asarray(_reference(x2, weight, bias)),
                               atol=1e-5, rtol=1e-5)
    assert out2.shape == (N, C_out, D2, H2, W2)

    # bf16 output path (cuts write traffic ~50% when the consumer tolerates it).
    out_bf16 = jax.block_until_ready(
        simple_head_forward(x, weight, bias, out_dtype=jnp.bfloat16))
    np.testing.assert_allclose(np.asarray(out_bf16.astype(jnp.float32)),
                               np.asarray(_reference(x, weight, bias)),
                               atol=1e-2, rtol=1e-2)

    print("KERNEL_OK")
</pallas_src>

<mosaic_0001>
module attributes {stable_mosaic.version = 11 : i64} {
  func.func @_head_kernel(%arg0: i32, %arg1: i32, %arg2: memref<1x4x512xf32, #tpu.memory_space<vmem>>, %arg3: memref<8x4xf32, #tpu.memory_space<vmem>>, %arg4: memref<8x1xf32, #tpu.memory_space<vmem>>, %arg5: memref<1x8x512xf32, #tpu.memory_space<vmem>>) attributes {dimension_semantics = [#tpu.dimension_semantics<parallel>, #tpu.dimension_semantics<parallel>], iteration_bounds = array<i64: 2, 1>, scalar_prefetch = 0 : i64, scratch_operands = 0 : i64, tpu.core_type = #tpu.core_type<tc>, window_params = [{transform_indices = @transform_0, window_bounds = array<i64: 1, 4, 512>}, {pipeline_mode = #tpu.pipeline_mode<synchronous>, transform_indices = @transform_1, window_bounds = array<i64: 8, 4>}, {pipeline_mode = #tpu.pipeline_mode<synchronous>, transform_indices = @transform_2, window_bounds = array<i64: 8, 1>}, {transform_indices = @transform_3, window_bounds = array<i64: 1, 8, 512>}]} {
    %c0 = arith.constant 0 : index
    %c0_0 = arith.constant 0 : index
    %0 = vector.load %arg3[%c0, %c0_0] : memref<8x4xf32, #tpu.memory_space<vmem>>, vector<8x4xf32>
    %c0_1 = arith.constant 0 : index
    %c0_2 = arith.constant 0 : index
    %c0_3 = arith.constant 0 : index
    %1 = vector.load %arg2[%c0_1, %c0_2, %c0_3] : memref<1x4x512xf32, #tpu.memory_space<vmem>>, vector<1x4x512xf32>
    %2 = vector.shape_cast %1 : vector<1x4x512xf32> to vector<4x512xf32>
    %cst = arith.constant dense<0.000000e+00> : vector<8x512xf32>
    %3 = tpu.matmul %0, %2, %cst {dimension_numbers = #tpu.dot_dimension_numbers<[1], [0], [0], [1], [0, 0, 1, 1], [], []>} : vector<8x4xf32>, vector<4x512xf32>, vector<8x512xf32> -> vector<8x512xf32>
    %c0_4 = arith.constant 0 : index
    %c0_5 = arith.constant 0 : index
    %4 = vector.load %arg4[%c0_4, %c0_5] : memref<8x1xf32, #tpu.memory_space<vmem>>, vector<8x1xf32>
    %5 = vector.broadcast %4 : vector<8x1xf32> to vector<8x512xf32>
    %6 = arith.addf %3, %5 : vector<8x512xf32>
    %cst_6 = arith.constant 5.000000e-01 : f32
    %7 = vector.broadcast %cst_6 : f32 to vector<8x512xf32>
    %8 = arith.mulf %7, %6 : vector<8x512xf32>
    %9 = math.tanh %8 : vector<8x512xf32>
    %cst_7 = arith.constant 1.000000e+00 : f32
    %10 = vector.broadcast %cst_7 : f32 to vector<8x512xf32>
    %11 = arith.addf %9, %10 : vector<8x512xf32>
    %cst_8 = arith.constant 5.000000e-01 : f32
    %12 = vector.broadcast %cst_8 : f32 to vector<8x512xf32>
    %13 = arith.mulf %12, %11 : vector<8x512xf32>
    %c0_9 = arith.constant 0 : index
    %c0_10 = arith.constant 0 : index
    %c0_11 = arith.constant 0 : index
    %14 = vector.load %arg5[%c0_9, %c0_10, %c0_11] : memref<1x8x512xf32, #tpu.memory_space<vmem>>, vector<1x8x512xf32>
    %15 = vector.shape_cast %14 : vector<1x8x512xf32> to vector<8x512xf32>
    %16 = vector.shape_cast %13 : vector<8x512xf32> to vector<1x8x512xf32>
    tpu.vector_store %arg5[%c0_9, %c0_10, %c0_11], %16 {strides = array<i32>} : memref<1x8x512xf32, #tpu.memory_space<vmem>>, vector<1x8x512xf32>,
    return
  }
  func.func @transform_0(%arg0: i32, %arg1: i32) -> (i32, i32, i32) {
    %c0_i32 = arith.constant 0 : i32
    %c0_i32_0 = arith.constant 0 : i32
    return %arg0, %c0_i32, %arg1 : i32, i32, i32
  }
  func.func @transform_1(%arg0: i32, %arg1: i32) -> (i32, i32) {
    %c0_i32 = arith.constant 0 : i32
    %c0_i32_0 = arith.constant 0 : i32
    %c0_i32_1 = arith.constant 0 : i32
    return %c0_i32, %c0_i32_0 : i32, i32
  }
  func.func @transform_2(%arg0: i32, %arg1: i32) -> (i32, i32) {
    %c0_i32 = arith.constant 0 : i32
    %c0_i32_0 = arith.constant 0 : i32
    %c0_i32_1 = arith.constant 0 : i32
    return %c0_i32, %c0_i32_0 : i32, i32
  }
  func.func @transform_3(%arg0: i32, %arg1: i32) -> (i32, i32, i32) {
    %c0_i32 = arith.constant 0 : i32
    %c0_i32_0 = arith.constant 0 : i32
    return %arg0, %c0_i32, %arg1 : i32, i32, i32
  }
}

</mosaic_0001>

<llo_original>
// kernel: tpu_custom_call.1
$region0: #{tpu_custom_call.1}
  #allocation0 [shape = 'u32[]', space=smem, size = 0x4, offset = 0x4, fixed_abs, tag = 'smem constant byte address 0x4 - core index']
  #allocation1 [shape = 'u32[144,128]{1,0:T(1,128)}', space=vmem, size = 0x12000, scoped, tag = 'internal scratch']
  %s0 = inlined_call_operand.hbm [shape: f32[2,4,512], index: 0, kind: input, shape index: {}]
  %s1 = inlined_call_operand.vmem [shape: f32[8,4], index: 1, kind: input, shape index: {}]
  %s2 = inlined_call_operand.vmem [shape: f32[8,1], index: 2, kind: input, shape index: {}]
  %s3 = inlined_call_operand.hbm [shape: f32[2,8,512], index: 3, kind: output, shape index: {}]
  %s4 = sld [smem:[#allocation0]]
  $region49: #{tpu_custom_call.1} parent=0
    _
  %s6 = ssub.s32 1, %s4
  %s7 = scalar_select 0, %s6, %s4
  $region1: #{tpu_custom_call.1} parent=0
    #allocation2 [shape = 'u8[16384]{0}', space=vmem, size = 0x4000, scoped, tag = 'input window, operand 0']
    #allocation3 [shape = 's32[2]{0}', space=sflag, size = 0x8, scoped, tag = 'scoped memory for tpu_custom_call.1']
    #allocation4 [shape = 's32[2]{0}', space=sflag, size = 0x8, scoped, tag = 'scoped memory for tpu_custom_call.1']
    #allocation5 [shape = 'u8[32768]{0}', space=vmem, size = 0x8000, scoped, tag = 'output window, operand 0']
    %8 = vsyncpa [#allocation3], 0
    %s9 = scalar_lea.sflag [#allocation3], 1
    %10 = vsyncpa %s9, 0
    %11 = vsyncpa [#allocation4], 0
    %s12 = scalar_lea.sflag [#allocation4], 1
    %13 = vsyncpa %s12, 0
    loop: start=0, step=1, limit=4
    $region2: #{tpu_custom_call.1} parent=1 // loop_pre_header
      _
    $region3: #{tpu_custom_call.1} parent=1 // loop_header
      %s15 = sphi 0, %s19
      %p16 = scmp.ge.s32.totalorder %s15, 4
      %s22 = sphi 0, %s34
      %s23 = sphi 0, %s30
      %s24 = sphi 0, %s22
      %s25 = sphi 0, %s23
      %s26 = sphi 0, %s24
      %s27 = sphi 0, %s25
      %s39 = sphi 0, %s41
      %s42 = sphi 0, %s39
      %s43 = sphi 0, %s42
      %s59 = sphi 0, %s43
      %s63 = sphi 0, %s63
      %s65 = sphi 0, %s63
      %s66 = sphi 0, %s65
      %s80 = sphi 0, %s66
      %s84 = sphi 0, %s84
      %s86 = sphi 0, %s84
      %s87 = sphi 0, %s86
      %s101 = sphi 0, %s87
      %s109 = sphi 0, %s111
      %s112 = sphi 0, %s109
      %s113 = sphi 0, %s112
      %s129 = sphi 0, %s113
    $region4: #{tpu_custom_call.1} parent=1 // loop_header_branch
      %18 = sbr.rel (%p16) target = $region8
    $region5: #{tpu_custom_call.1} parent=1 // loop_body
      %s20 = ssub.s32 %s15, 1
      %s21 = ssub.s32 %s15, 2
      %s28 = sadd.s32 1, %s23
      %p29 = scmp.ge.s32.totalorder %s28, 1
      %s30 = scalar_select %p29, 0, %s28
      %s31 = sadd.s32 1, %s22
      %s32 = scalar_select %p29, %s31, %s22
      %p33 = scmp.ge.s32.totalorder %s32, 2
      %s34 = scalar_select %p33, 0, %s32
      %s35 = ssub.s32 %s22, %s34
      %s36 = ssub.s32 %s23, %s30
      %s37 = sor.u32 %s35, %s36
      %p38 = scmp.eq.s32.totalorder %s37, 0
      %s40 = sadd.s32 %s39, 1
      %s41 = scalar_select %p38, %s39, %s40
      %p44 = pneg %p38
      %p45 = scmp.eq.s32.totalorder %s15, 1
      %p46 = por %p44, %p45
      %p47 = scmp.ne.s32.totalorder %s39, %s42
      %p48 = scmp.eq.s32.totalorder %s15, 0
      %p49 = por %p47, %p48
      %p50 = scmp.ne.s32.totalorder %s39, %s42
      %p51 = scmp.eq.s32.totalorder %s20, 1
      %p52 = por %p50, %p51
      %p53 = scmp.ne.s32.totalorder %s42, %s43
      %p54 = scmp.eq.s32.totalorder %s20, 0
      %p55 = por %p53, %p54
      %p56 = scmp.ne.s32.totalorder %s42, %s43
      %p57 = scmp.eq.s32.totalorder %s21, 1
      %p58 = por %p56, %p57
      %p60 = scmp.ne.s32.totalorder %s43, %s59
      %p61 = scmp.eq.s32.totalorder %s21, 0
      %p62 = por %p60, %p61
      %s64 = sadd.s32 %s63, 1
      %p67 = scmp.eq.s32.totalorder %s15, 1
      %p68 = scmp.ne.s32.totalorder %s63, %s65
      %p69 = scmp.eq.s32.totalorder %s15, 0
      %p70 = por %p68, %p69
      %p71 = scmp.ne.s32.totalorder %s63, %s65
      %p72 = scmp.eq.s32.totalorder %s20, 1
      %p73 = por %p71, %p72
      %p74 = scmp.ne.s32.totalorder %s65, %s66
      %p75 = scmp.eq.s32.totalorder %s20, 0
      %p76 = por %p74, %p75
      %p77 = scmp.ne.s32.totalorder %s65, %s66
      %p78 = scmp.eq.s32.totalorder %s21, 1
      %p79 = por %p77, %p78
      %p81 = scmp.ne.s32.totalorder %s66, %s80
      %p82 = scmp.eq.s32.totalorder %s21, 0
      %p83 = por %p81, %p82
      %s85 = sadd.s32 %s84, 1
      %p88 = scmp.eq.s32.totalorder %s15, 1
      %p89 = scmp.ne.s32.totalorder %s84, %s86
      %p90 = scmp.eq.s32.totalorder %s15, 0
      %p91 = por %p89, %p90
      %p92 = scmp.ne.s32.totalorder %s84, %s86
      %p93 = scmp.eq.s32.totalorder %s20, 1
      %p94 = por %p92, %p93
      %p95 = scmp.ne.s32.totalorder %s86, %s87
      %p96 = scmp.eq.s32.totalorder %s20, 0
      %p97 = por %p95, %p96
      %p98 = scmp.ne.s32.totalorder %s86, %s87
      %p99 = scmp.eq.s32.totalorder %s21, 1
      %p100 = por %p98, %p99
      %p102 = scmp.ne.s32.totalorder %s87, %s101
      %p103 = scmp.eq.s32.totalorder %s21, 0
      %p104 = por %p102, %p103
      %s105 = ssub.s32 %s22, %s34
      %s106 = ssub.s32 %s23, %s30
      %s107 = sor.u32 %s105, %s106
      %p108 = scmp.eq.s32.totalorder %s107, 0
      %s110 = sadd.s32 %s109, 1
      %s111 = scalar_select %p108, %s109, %s110
      %p114 = pneg %p108
      %p115 = scmp.eq.s32.totalorder %s15, 1
      %p116 = por %p114, %p115
      %p117 = scmp.ne.s32.totalorder %s109, %s112
      %p118 = scmp.eq.s32.totalorder %s15, 0
      %p119 = por %p117, %p118
      %p120 = scmp.ne.s32.totalorder %s109, %s112
      %p121 = scmp.eq.s32.totalorder %s20, 1
      %p122 = por %p120, %p121
      %p123 = scmp.ne.s32.totalorder %s112, %s113
      %p124 = scmp.eq.s32.totalorder %s20, 0
      %p125 = por %p123, %p124
      %p126 = scmp.ne.s32.totalorder %s112, %s113
      %p127 = scmp.eq.s32.totalorder %s21, 1
      %p128 = por %p126, %p127
      %p130 = scmp.ne.s32.totalorder %s113, %s129
      %p131 = scmp.eq.s32.totalorder %s21, 0
      %p132 = por %p130, %p131
      %p133 = scmp.le.s32.totalorder 1, %s15
      %p134 = scmp.lt.s32.totalorder %s15, 3
      %p135 = pnand %p133, %p134
      %p136 = pneg %p135
      // Predicated region
      $region9: #{tpu_custom_call.1} parent=5 // pred_check
        _
      $region10: #{tpu_custom_call.1} parent=5 // pred_check_branch
        %138 = sbr.rel (%p135) target = $region12
      $region11: #{tpu_custom_call.1} parent=5 // pred_region
        %s139 = ssub.s32 %s15, 1
        // Predicated region
        $region13: #{tpu_custom_call.1} parent=11 // pred_check
          %p140 = pneg %p76
        $region14: #{tpu_custom_call.1} parent=11 // pred_check_branch
          %142 = sbr.rel (%p140) target = $region16
        $region15: #{tpu_custom_call.1} parent=11 // pred_region
          _
        $region16: #{tpu_custom_call.1} parent=11 // pred_fallthru
          _
        // Predicated region
        $region17: #{tpu_custom_call.1} parent=11 // pred_check
          %p143 = pneg %p97
        $region18: #{tpu_custom_call.1} parent=11 // pred_check_branch
          %145 = sbr.rel (%p143) target = $region20
        $region19: #{tpu_custom_call.1} parent=11 // pred_region
          _
        $region20: #{tpu_custom_call.1} parent=11 // pred_fallthru
          _
      $region12: #{tpu_custom_call.1} parent=5 // pred_fallthru
        _
      %p146 = scmp.lt.s32.totalorder %s15, 2
      // Predicated region
      $region21: #{tpu_custom_call.1} parent=5 // pred_check
        %p147 = pneg %p146
      $region22: #{tpu_custom_call.1} parent=5 // pred_check_branch
        %149 = sbr.rel (%p147) target = $region24
      $region23: #{tpu_custom_call.1} parent=5 // pred_region
        // Predicated region
        $region25: #{tpu_custom_call.1} parent=23 // pred_check
          %p150 = pneg %p49
        $region26: #{tpu_custom_call.1} parent=23 // pred_check_branch
          %152 = sbr.rel (%p150) target = $region28
        $region27: #{tpu_custom_call.1} parent=23 // pred_region
          %s153 = sand.u32 %s39, 1
          %s154 = scalar_lea.sflag [#allocation3], %s153
          %s155 = sand.u32 %s39, 1
          %s156 = smul.addr %s155, 16
          %s157 = scalar_lea.vmem [#allocation2], %s156
          %s158 = smul.u32 4, %s23
          %s160 = ssub.s32 256, 256
          %161 = vsyncadd %s154, %s160
          %s162 = smul.addr %s22, 4
          %s163 = sadd.s32 %s158, %s162
          %s164 = smul.addr %s163, 64
          %s165 = scalar_lea.hbm %s0, %s164
          %s167 = sshll.u32 %s157, 4
          %s168 = int_to_ptr.vmem [resolvable:$true] %s167
          %170 = dma.hbm_to_vmem [thread:$0]  %s165, 256, %s168, %s154
        $region28: #{tpu_custom_call.1} parent=23 // pred_fallthru
          _
      $region24: #{tpu_custom_call.1} parent=5 // pred_fallthru
        _
      %p171 = scmp.le.s32.totalorder 1, %s15
      %p172 = scmp.lt.s32.totalorder %s15, 3
      %p173 = pnand %p171, %p172
      %p174 = pneg %p173
      // Predicated region
      $region29: #{tpu_custom_call.1} parent=5 // pred_check
        _
      $region30: #{tpu_custom_call.1} parent=5 // pred_check_branch
        %176 = sbr.rel (%p173) target = $region32
      $region31: #{tpu_custom_call.1} parent=5 // pred_region
        %s177 = ssub.s32 %s15, 1
        %s178 = sand.u32 %s42, 1
        %s179 = scalar_lea.sflag [#allocation3], %s178
        %s180 = sand.u32 %s42, 1
        %s181 = smul.addr %s180, 16
        %s182 = scalar_lea.vmem [#allocation2], %s181
        // Predicated region
        $region33: #{tpu_custom_call.1} parent=31 // pred_check
          %p183 = pneg %p55
        $region34: #{tpu_custom_call.1} parent=31 // pred_check_branch
          %185 = sbr.rel (%p183) target = $region36
        $region35: #{tpu_custom_call.1} parent=31 // pred_region
          %186 = dma.done %s179, 256
        $region36: #{tpu_custom_call.1} parent=31 // pred_fallthru
          _
        %s187 = sand.u32 %s42, 1
        %s188 = scalar_lea.sflag [#allocation3], %s187
        %s189 = sand.u32 %s42, 1
        %s190 = smul.addr %s189, 16
        %s191 = scalar_lea.vmem [#allocation2], %s190
        %p192 = pneg %p55
        %p193 = pneg %p52
        %p194 = pneg %p76
        %p195 = pneg %p73
        %p196 = pneg %p97
        %p197 = pneg %p94
        %p198 = pneg %p125
        %p199 = pneg %p122
        %s200 = sand.u32 %s112, 1
        %s201 = scalar_lea.sflag [#allocation4], %s200
        %s202 = sand.u32 %s112, 1
        %s203 = smul.addr %s202, 32
        %s204 = scalar_lea.vmem [#allocation5], %s203
        %s205 = smul.u32 4, %s25
        %s206 = smul.u32 4, %s25
        %v207 = vld [vmem:[%s1] sm:$0xff]
        %v208 = vld [vmem:[%s182] sm:$0xff]
        %v209 = vld [vmem:[%s182 + $0x8] sm:$0xff]
        %v210 = vld [vmem:[%s2] sm:$0xff]
        %212 = vset.pattern.permute.xlu0 0
        %213 = vperm.xlu0 %212, %v210
        %v214 = vpop.permute.xlu0 %213
        %v218 = vcombine.high %v208, %v208
        %v219 = vcombine.high %v209, %v209
        %vm220 = vcmask 31744
        %v222 = vsel %vm220, %v207, 0
        %vm224 = vcmask 1043456
        %v225 = vsel %vm224, %v208, 0
        %v227 = vsel %vm224, %v218, 0
        %v229 = vsel %vm224, %v209, 0
        %v231 = vsel %vm224, %v219, 0
        %233 = vmatprep.subr.mxu0 %v227
        %234 = vmatpush1.msra.mxu0 %v225
        %235 = vmatprep.subr.mxu0 0.0
        %236 = vmatpush1.msra.mxu0 0.0
        %237 = vmatprep.subr.mxu0 0.0
        %238 = vmatpush1.msra.mxu0 0.0
        %239 = vmatprep.subr.mxu0 0.0
        %240 = vmatpush1.msra.mxu0 0.0
        %241 = vmatprep.subr.mxu0 0.0
        %242 = vmatpush1.msra.mxu0 0.0
        %243 = vmatprep.subr.mxu0 0.0
        %244 = vmatpush1.msra.mxu0 0.0
        %245 = vmatprep.subr.mxu0 0.0
        %246 = vmatpush1.msra.mxu0 0.0
        %247 = vmatprep.subr.mxu0 0.0
        %248 = vmatpush1.msra.mxu0 0.0
        %249 = vmatprep.subr.mxu0 0.0
        %250 = vmatpush1.msra.mxu0 0.0
        %251 = vmatprep.subr.mxu0 0.0
        %252 = vmatpush1.msra.mxu0 0.0
        %253 = vmatprep.subr.mxu0 0.0
        %254 = vmatpush1.msra.mxu0 0.0
        %255 = vmatprep.subr.mxu0 0.0
        %256 = vmatpush1.msra.mxu0 0.0
        %257 = vmatprep.subr.mxu0 0.0
        %258 = vmatpush1.msra.mxu0 0.0
        %259 = vmatprep.subr.mxu0 0.0
        %260 = vmatpush1.msra.mxu0 0.0
        %261 = vmatprep.subr.mxu0 0.0
        %262 = vmatpush1.msra.mxu0 0.0
        %263 = vmatprep.subr.mxu0 0.0
        %264 = vmatpush1.msra.mxu0 0.0
        %265 = vmatprep.subr.mxu0 0.0
        %266 = vmatpush1.msra.mxu0 0.0
        %267 = vmatprep.subr.mxu0 0.0
        %268 = vmatpush1.msra.mxu0 0.0
        %269 = vmatprep.subr.mxu0 0.0
        %270 = vmatpush1.msra.mxu0 0.0
        %271 = vmatprep.subr.mxu0 0.0
        %272 = vmatpush1.msra.mxu0 0.0
        %273 = vmatprep.subr.mxu0 0.0
        %274 = vmatpush1.msra.mxu0 0.0
        %275 = vmatprep.subr.mxu0 0.0
        %276 = vmatpush1.msra.mxu0 0.0
        %277 = vmatprep.subr.mxu0 0.0
        %278 = vmatpush1.msra.mxu0 0.0
        %279 = vmatprep.subr.mxu0 0.0
        %280 = vmatpush1.msra.mxu0 0.0
        %281 = vmatprep.subr.mxu0 0.0
        %282 = vmatpush1.msra.mxu0 0.0
        %283 = vmatprep.subr.mxu0 0.0
        %284 = vmatpush1.msra.mxu0 0.0
        %285 = vmatprep.subr.mxu0 0.0
        %286 = vmatpush1.msra.mxu0 0.0
        %287 = vmatprep.subr.mxu0 0.0
        %288 = vmatpush1.msra.mxu0 0.0
        %289 = vmatprep.subr.mxu0 0.0
        %290 = vmatpush1.msra.mxu0 0.0
        %291 = vmatprep.subr.mxu0 0.0
        %292 = vmatpush1.msra.mxu0 0.0
        %293 = vmatprep.subr.mxu0 0.0
        %294 = vmatpush1.msra.mxu0 0.0
        %295 = vmatprep.subr.mxu0 0.0
        %296 = vmatpush1.msra.mxu0 0.0
        %297 = vmatprep.mubr.f32.mxu0 0.0
        %298 = vmatmul.mubr.f32.gmra.mrb[0].mxu0 %v222
        %v299 = vpop.f32.mrb[0].mxu0
        %v300 = vadd.f32 %v214, %v299
        %v301 = vpop.f32.mrb[0].mxu0
        %v302 = vadd.f32 %v214, %v301
        %303 = vdwg.mxu0
        %304 = vmatprep.subr.mxu0 %v231
        %305 = vmatpush1.msra.mxu0 %v229
        %306 = vmatprep.subr.mxu0 0.0
        %307 = vmatpush1.msra.mxu0 0.0
        %308 = vmatprep.subr.mxu0 0.0
        %309 = vmatpush1.msra.mxu0 0.0
        %310 = vmatprep.subr.mxu0 0.0
        %311 = vmatpush1.msra.mxu0 0.0
        %312 = vmatprep.subr.mxu0 0.0
        %313 = vmatpush1.msra.mxu0 0.0
        %314 = vmatprep.subr.mxu0 0.0
        %315 = vmatpush1.msra.mxu0 0.0
        %316 = vmatprep.subr.mxu0 0.0
        %317 = vmatpush1.msra.mxu0 0.0
        %318 = vmatprep.subr.mxu0 0.0
        %319 = vmatpush1.msra.mxu0 0.0
        %320 = vmatprep.subr.mxu0 0.0
        %321 = vmatpush1.msra.mxu0 0.0
        %322 = vmatprep.subr.mxu0 0.0
        %323 = vmatpush1.msra.mxu0 0.0
        %324 = vmatprep.subr.mxu0 0.0
        %325 = vmatpush1.msra.mxu0 0.0
        %326 = vmatprep.subr.mxu0 0.0
        %327 = vmatpush1.msra.mxu0 0.0
        %328 = vmatprep.subr.mxu0 0.0
        %329 = vmatpush1.msra.mxu0 0.0
        %330 = vmatprep.subr.mxu0 0.0
        %331 = vmatpush1.msra.mxu0 0.0
        %332 = vmatprep.subr.mxu0 0.0
        %333 = vmatpush1.msra.mxu0 0.0
        %334 = vmatprep.subr.mxu0 0.0
        %335 = vmatpush1.msra.mxu0 0.0
        %336 = vmatprep.subr.mxu0 0.0
        %337 = vmatpush1.msra.mxu0 0.0
        %338 = vmatprep.subr.mxu0 0.0
        %339 = vmatpush1.msra.mxu0 0.0
        %340 = vmatprep.subr.mxu0 0.0
        %341 = vmatpush1.msra.mxu0 0.0
        %342 = vmatprep.subr.mxu0 0.0
        %343 = vmatpush1.msra.mxu0 0.0
        %344 = vmatprep.subr.mxu0 0.0
        %345 = vmatpush1.msra.mxu0 0.0
        %346 = vmatprep.subr.mxu0 0.0
        %347 = vmatpush1.msra.mxu0 0.0
        %348 = vmatprep.subr.mxu0 0.0
        %349 = vmatpush1.msra.mxu0 0.0
        %350 = vmatprep.subr.mxu0 0.0
        %351 = vmatpush1.msra.mxu0 0.0
        %352 = vmatprep.subr.mxu0 0.0
        %353 = vmatpush1.msra.mxu0 0.0
        %354 = vmatprep.subr.mxu0 0.0
        %355 = vmatpush1.msra.mxu0 0.0
        %356 = vmatprep.subr.mxu0 0.0
        %357 = vmatpush1.msra.mxu0 0.0
        %358 = vmatprep.subr.mxu0 0.0
        %359 = vmatpush1.msra.mxu0 0.0
        %360 = vmatprep.subr.mxu0 0.0
        %361 = vmatpush1.msra.mxu0 0.0
        %362 = vmatprep.subr.mxu0 0.0
        %363 = vmatpush1.msra.mxu0 0.0
        %364 = vmatprep.subr.mxu0 0.0
        %365 = vmatpush1.msra.mxu0 0.0
        %366 = vmatprep.subr.mxu0 0.0
        %367 = vmatpush1.msra.mxu0 0.0
        %368 = vmatprep.mubr.f32.mxu0 0.0
        %369 = vmatmul.mubr.f32.gmra.mrb[0].mxu0 %v222
        %v370 = vpop.f32.mrb[0].mxu0
        %v371 = vadd.f32 %v214, %v370
        %v372 = vpop.f32.mrb[0].mxu0
        %v373 = vadd.f32 %v214, %v372
        %374 = vdwg.mxu0
        %v375 = vmul.f32 %v300, 0.5
        %v376 = vmul.f32 %v302, 0.5
        %v377 = vmul.f32 %v371, 0.5
        %v378 = vmul.f32 %v373, 0.5
        %v379 = vtanh.pop %v375
        %v380 = vtanh.pop %v376
        %v381 = vtanh.pop %v377
        %v382 = vtanh.pop %v378
        %v383 = vadd.f32 %v379, 1.0
        %v384 = vadd.f32 %v380, 1.0
        %v385 = vadd.f32 %v381, 1.0
        %v386 = vadd.f32 %v382, 1.0
        %v387 = vmul.f32 %v383, 0.5
        %v388 = vmul.f32 %v384, 0.5
        %v389 = vmul.f32 %v385, 0.5
        %v390 = vmul.f32 %v386, 0.5
        %391 = vst [vmem:[%s204] sm:$0xff] %v387
        %392 = vst [vmem:[%s204 + $0x8] sm:$0xff] %v388
        %393 = vst [vmem:[%s204 + $0x10] sm:$0xff] %v389
        %394 = vst [vmem:[%s204 + $0x18] sm:$0xff] %v390
        %s395 = sand.u32 %s112, 1
        %s396 = scalar_lea.sflag [#allocation4], %s395
        %s397 = sand.u32 %s112, 1
        %s398 = smul.addr %s397, 32
        %s399 = scalar_lea.vmem [#allocation5], %s398
        // Predicated region
        $region37: #{tpu_custom_call.1} parent=31 // pred_check
          %p400 = pneg %p122
        $region38: #{tpu_custom_call.1} parent=31 // pred_check_branch
          %402 = sbr.rel (%p400) target = $region40
        $region39: #{tpu_custom_call.1} parent=31 // pred_region
          %s403 = smul.u32 4, %s25
          %s405 = ssub.s32 512, 512
          %406 = vsyncadd %s396, %s405
          %s407 = smul.addr %s24, 4
          %s408 = sadd.s32 %s403, %s407
          %s409 = smul.addr %s408, 128
          %s410 = scalar_lea.hbm %s3, %s409
          %s412 = sshll.u32 %s399, 4
          %s413 = int_to_ptr.vmem [resolvable:$true] %s412
          %415 = dma.vmem_to_hbm [thread:$0]  %s413, 512, %s410, %s396
        $region40: #{tpu_custom_call.1} parent=31 // pred_fallthru
          _
      $region32: #{tpu_custom_call.1} parent=5 // pred_fallthru
        _
      %p416 = scmp.le.s32.totalorder 2, %s15
      // Predicated region
      $region41: #{tpu_custom_call.1} parent=5 // pred_check
        %p417 = pneg %p416
      $region42: #{tpu_custom_call.1} parent=5 // pred_check_branch
        %419 = sbr.rel (%p417) target = $region44
      $region43: #{tpu_custom_call.1} parent=5 // pred_region
        %s420 = ssub.s32 %s15, 2
        // Predicated region
        $region45: #{tpu_custom_call.1} parent=43 // pred_check
          %p421 = pneg %p128
        $region46: #{tpu_custom_call.1} parent=43 // pred_check_branch
          %423 = sbr.rel (%p421) target = $region48
        $region47: #{tpu_custom_call.1} parent=43 // pred_region
          %s424 = sand.u32 %s113, 1
          %s425 = scalar_lea.sflag [#allocation4], %s424
          %s426 = sand.u32 %s113, 1
          %s427 = smul.addr %s426, 32
          %s428 = scalar_lea.vmem [#allocation5], %s427
          %429 = dma.done %s425, 512
        $region48: #{tpu_custom_call.1} parent=43 // pred_fallthru
          _
      $region44: #{tpu_custom_call.1} parent=5 // pred_fallthru
        _
    $region6: #{tpu_custom_call.1} parent=1 // loop_footer
      %s19 = sadd.s32 1, %s15
    $region7: #{tpu_custom_call.1} parent=1 // loop_footer_branch
      %14 = sbr.rel target = $region3
    $region8: #{tpu_custom_call.1} parent=1 // loop_exit
      _
    %430 = vsyncpa [#allocation3], 1
    %s431 = scalar_lea.sflag [#allocation3], 1
    %432 = vsyncpa %s431, 1
    %433 = vsyncpa [#allocation4], 1
    %s434 = scalar_lea.sflag [#allocation4], 1
    %435 = vsyncpa %s434, 1

</llo_original>
